<compile_context>
chip_gen: v7x
topology: tpu7x:2x2x1
jax: 0.10.0
libtpu: 0.0.40
codegen_flags: <defaults>
</compile_context>

<pallas_src>
import functools

import jax
import jax.numpy as jnp
from jax import lax
from jax.experimental import pallas as pl
from jax.experimental.pallas import tpu as pltpu


def _round_up(x: int, m: int) -> int:
    return (x + m - 1) // m * m


def _bow_kernel(tok_ref, table_ref, avg_ref, enc_ref, *,
                seq_len, tile_len, inv_len, embed_dim):
    """One grid step: gather TL embedding rows for one batch row, write the
    dense (1, TL, D) encoder-output tile, and fold the tile sum into the
    resident average accumulator.

    tok_ref   : [B, Lp] int32 in SMEM (scalar-prefetched token ids)
    table_ref : [V, D]  f32 in VMEM (resident, constant block index)
    avg_ref   : [1, 1, D] f32 resident output block (accumulator)
    enc_ref   : [1, TL, D] f32 output tile
    """
    b = pl.program_id(0)
    lt = pl.program_id(1)
    l0 = lt * tile_len

    @pl.when(lt == 0)
    def _init():
        avg_ref[...] = jnp.zeros_like(avg_ref)

    # Dropout is identity in eval mode.
    # TODO(synk): training-mode dropout (random mask + 1/(1-p) scale) not emitted.
    def gather_one(i, acc):
        tok = tok_ref[b, l0 + i]                                  # scalar (SMEM)
        row = table_ref[pl.ds(tok, 1), :].astype(jnp.float32)     # [1, D] VMEM read
        enc_ref[0, pl.ds(i, 1), :] = row.astype(enc_ref.dtype)    # dense tile fill
        valid = (l0 + i) < seq_len                                # mask Lp padding
        return acc + jnp.where(valid, row, jnp.zeros_like(row))

    tile_sum = lax.fori_loop(
        0, tile_len, gather_one,
        jnp.zeros((1, embed_dim), jnp.float32),
        unroll=min(tile_len, 8),
    )

    # Single accumulator update per tile (not per token).
    avg_ref[...] = avg_ref[...] + tile_sum.reshape(avg_ref.shape)

    @pl.when(lt == pl.num_programs(1) - 1)
    def _finalize():
        avg_ref[...] = avg_ref[...] * inv_len


def bow_forward(input_batch, embedding_table, input_lengths, *, tile_len_target=256):
    """input_batch: [B, L] int; embedding_table: [V, D] f32 (row padding_idx == 0)."""
    B, L = input_batch.shape
    V, D = embedding_table.shape

    # Sequence tile: multiple of 8 sublanes; cover the whole sequence when short.
    if L <= tile_len_target:
        TL = _round_up(L, 8)
    else:
        TL = _round_up(tile_len_target, 8)
    Lp = _round_up(L, TL)
    n_lt = Lp // TL

    # Token ids drive a dynamic in-VMEM row read -> clamp defensively so a bad
    # id can never index out of range (silent-clamp differs from torch, which
    # would raise on malformed ids; numerics for valid ids are identical).
    tokens = jnp.clip(input_batch.astype(jnp.int32), 0, V - 1)
    if Lp != L:
        tokens = jnp.pad(tokens, ((0, 0), (0, Lp - L)))

    table = embedding_table.astype(jnp.float32)

    kernel = functools.partial(
        _bow_kernel,
        seq_len=L, tile_len=TL, inv_len=1.0 / L, embed_dim=D,
    )

    avg, enc = pl.pallas_call(
        kernel,
        out_shape=(
            jax.ShapeDtypeStruct((B, 1, D), jnp.float32),    # average_embedding
            jax.ShapeDtypeStruct((B, Lp, D), jnp.float32),   # encoder_outputs
        ),
        grid_spec=pltpu.PrefetchScalarGridSpec(
            num_scalar_prefetch=1,                           # tokens -> SMEM
            grid=(B, n_lt),
            in_specs=[
                # Full table resident in VMEM; constant block index -> fetched
                # once, never re-DMA'd across the whole grid.
                pl.BlockSpec((V, D), lambda b, lt, tok: (0, 0)),
            ],
            out_specs=[
                # avg block stays resident across the whole lt loop (accumulator).
                pl.BlockSpec((1, 1, D), lambda b, lt, tok: (b, 0, 0)),
                # Dense (1, TL, D) encoder-output tile per step.
                pl.BlockSpec((1, TL, D), lambda b, lt, tok: (b, lt, 0)),
            ],
        ),
        compiler_params=pltpu.CompilerParams(
            dimension_semantics=("parallel", "arbitrary"),
        ),
    )(tokens, table)

    avg = avg.reshape(B, D)
    enc = enc[:, :L, :]
    return avg, {"encoder_outputs": enc, "sequence_lengths": input_lengths}


if __name__ == "__main__":
    batch_size = 2
    max_length = 8
    input_size = 16          # vocabulary size
    embedding_dim = 32
    padding_idx = 0

    key = jax.random.PRNGKey(0)
    k_emb, k_tok = jax.random.split(key)

    # Deterministic embedding table; padding_idx row zeroed (as nn.Embedding does).
    embedding_table = jax.random.normal(
        k_emb, (input_size, embedding_dim), jnp.float32
    )
    embedding_table = embedding_table.at[padding_idx].set(0.0)

    # Padded token batch.
    input_batch = jax.random.randint(
        k_tok, (batch_size, max_length), minval=1, maxval=input_size,
        dtype=jnp.int32,
    )
    input_lengths = [max_length, max_length - 3]
    # Pad second example beyond its length with padding_idx.
    input_batch = input_batch.at[1, input_lengths[1]:].set(padding_idx)

    avg, aux = bow_forward(input_batch, embedding_table, input_lengths)
    jax.block_until_ready((avg, aux["encoder_outputs"]))

    # Reference check in plain JAX (matches torch: mean over the padded length).
    ref_emb = embedding_table[input_batch]                    # [B, L, D]
    ref_avg = jnp.mean(ref_emb, axis=1)                       # [B, D]
    assert jnp.allclose(avg, ref_avg, atol=1e-5), "average mismatch"
    assert jnp.allclose(aux["encoder_outputs"], ref_emb, atol=1e-5), "embedding mismatch"

    print("KERNEL_OK")
</pallas_src>

<mosaic_0001>
module attributes {stable_mosaic.version = 11 : i64} {
  func.func @_bow_kernel(%arg0: i32, %arg1: i32, %arg2: memref<2x8xi32, #tpu.memory_space<smem>>, %arg3: memref<16x32xf32, #tpu.memory_space<vmem>>, %arg4: memref<1x1x32xf32, #tpu.memory_space<vmem>>, %arg5: memref<1x8x32xf32, #tpu.memory_space<vmem>>) attributes {dimension_semantics = [#tpu.dimension_semantics<parallel>, #tpu.dimension_semantics<arbitrary>], iteration_bounds = array<i64: 2, 1>, scalar_prefetch = 1 : i64, scratch_operands = 0 : i64, tpu.core_type = #tpu.core_type<tc>, window_params = [{pipeline_mode = #tpu.pipeline_mode<synchronous>, transform_indices = @transform_0, window_bounds = array<i64: 16, 32>}, {transform_indices = @transform_1, window_bounds = array<i64: 1, 1, 32>}, {transform_indices = @transform_2, window_bounds = array<i64: 1, 8, 32>}]} {
    %c8_i32 = arith.constant 8 : i32
    %0 = arith.muli %arg1, %c8_i32 : i32
    %c0_i32 = arith.constant 0 : i32
    %1 = arith.cmpi eq, %arg1, %c0_i32 : i32
    %2 = arith.extui %1 : i1 to i32
    %c0_i32_0 = arith.constant 0 : i32
    %3 = arith.cmpi ne, %2, %c0_i32_0 : i32
    scf.if %3 {
      %cst_50 = arith.constant 0.000000e+00 : f32
      %132 = vector.broadcast %cst_50 : f32 to vector<1x1x32xf32>
      %c0_51 = arith.constant 0 : index
      %c0_52 = arith.constant 0 : index
      %c0_53 = arith.constant 0 : index
      %133 = vector.load %arg4[%c0_51, %c0_52, %c0_53] : memref<1x1x32xf32, #tpu.memory_space<vmem>>, vector<1x1x32xf32>
      tpu.vector_store %arg4[%c0_51, %c0_52, %c0_53], %132 {strides = array<i32>} : memref<1x1x32xf32, #tpu.memory_space<vmem>>, vector<1x1x32xf32>,
    } else {
    }
    %cst = arith.constant 0.000000e+00 : f32
    %4 = vector.broadcast %cst : f32 to vector<1x32xf32>
    %c0_i32_1 = arith.constant 0 : i32
    %5 = arith.addi %0, %c0_i32_1 : i32
    %6 = arith.index_cast %arg0 : i32 to index
    %7 = arith.index_cast %5 : i32 to index
    %8 = memref.load %arg2[%6, %7] : memref<2x8xi32, #tpu.memory_space<smem>>
    %9 = arith.index_cast %8 : i32 to index
    %c0 = arith.constant 0 : index
    %10 = vector.load %arg3[%9, %c0] : memref<16x32xf32, #tpu.memory_space<vmem>>, vector<1x32xf32>
    %c0_2 = arith.constant 0 : index
    %11 = arith.index_cast %c0_i32_1 : i32 to index
    %c0_3 = arith.constant 0 : index
    %12 = vector.load %arg5[%c0_2, %11, %c0_3] : memref<1x8x32xf32, #tpu.memory_space<vmem>>, vector<1x1x32xf32>
    %13 = vector.shape_cast %12 : vector<1x1x32xf32> to vector<1x32xf32>
    %14 = vector.shape_cast %10 : vector<1x32xf32> to vector<1x1x32xf32>
    tpu.vector_store %arg5[%c0_2, %11, %c0_3], %14 {strides = array<i32>} : memref<1x8x32xf32, #tpu.memory_space<vmem>>, vector<1x1x32xf32>,
    %15 = arith.addi %0, %c0_i32_1 : i32
    %c8_i32_4 = arith.constant 8 : i32
    %16 = arith.cmpi slt, %15, %c8_i32_4 : i32
    %cst_5 = arith.constant 0.000000e+00 : f32
    %17 = vector.broadcast %cst_5 : f32 to vector<1x32xf32>
    %18 = arith.select %16, %10, %17 : vector<1x32xf32>
    %19 = arith.addf %4, %18 : vector<1x32xf32>
    %c1_i32 = arith.constant 1 : i32
    %20 = arith.addi %0, %c1_i32 : i32
    %21 = arith.index_cast %arg0 : i32 to index
    %22 = arith.index_cast %20 : i32 to index
    %23 = memref.load %arg2[%21, %22] : memref<2x8xi32, #tpu.memory_space<smem>>
    %24 = arith.index_cast %23 : i32 to index
    %c0_6 = arith.constant 0 : index
    %25 = vector.load %arg3[%24, %c0_6] : memref<16x32xf32, #tpu.memory_space<vmem>>, vector<1x32xf32>
    %c0_7 = arith.constant 0 : index
    %26 = arith.index_cast %c1_i32 : i32 to index
    %c0_8 = arith.constant 0 : index
    %27 = vector.load %arg5[%c0_7, %26, %c0_8] : memref<1x8x32xf32, #tpu.memory_space<vmem>>, vector<1x1x32xf32>
    %28 = vector.shape_cast %27 : vector<1x1x32xf32> to vector<1x32xf32>
    %29 = vector.shape_cast %25 : vector<1x32xf32> to vector<1x1x32xf32>
    tpu.vector_store %arg5[%c0_7, %26, %c0_8], %29 {strides = array<i32>} : memref<1x8x32xf32, #tpu.memory_space<vmem>>, vector<1x1x32xf32>,
    %30 = arith.addi %0, %c1_i32 : i32
    %c8_i32_9 = arith.constant 8 : i32
    %31 = arith.cmpi slt, %30, %c8_i32_9 : i32
    %cst_10 = arith.constant 0.000000e+00 : f32
    %32 = vector.broadcast %cst_10 : f32 to vector<1x32xf32>
    %33 = arith.select %31, %25, %32 : vector<1x32xf32>
    %34 = arith.addf %19, %33 : vector<1x32xf32>
    %c2_i32 = arith.constant 2 : i32
    %35 = arith.addi %0, %c2_i32 : i32
    %36 = arith.index_cast %arg0 : i32 to index
    %37 = arith.index_cast %35 : i32 to index
    %38 = memref.load %arg2[%36, %37] : memref<2x8xi32, #tpu.memory_space<smem>>
    %39 = arith.index_cast %38 : i32 to index
    %c0_11 = arith.constant 0 : index
    %40 = vector.load %arg3[%39, %c0_11] : memref<16x32xf32, #tpu.memory_space<vmem>>, vector<1x32xf32>
    %c0_12 = arith.constant 0 : index
    %41 = arith.index_cast %c2_i32 : i32 to index
    %c0_13 = arith.constant 0 : index
    %42 = vector.load %arg5[%c0_12, %41, %c0_13] : memref<1x8x32xf32, #tpu.memory_space<vmem>>, vector<1x1x32xf32>
    %43 = vector.shape_cast %42 : vector<1x1x32xf32> to vector<1x32xf32>
    %44 = vector.shape_cast %40 : vector<1x32xf32> to vector<1x1x32xf32>
    tpu.vector_store %arg5[%c0_12, %41, %c0_13], %44 {strides = array<i32>} : memref<1x8x32xf32, #tpu.memory_space<vmem>>, vector<1x1x32xf32>,
    %45 = arith.addi %0, %c2_i32 : i32
    %c8_i32_14 = arith.constant 8 : i32
    %46 = arith.cmpi slt, %45, %c8_i32_14 : i32
    %cst_15 = arith.constant 0.000000e+00 : f32
    %47 = vector.broadcast %cst_15 : f32 to vector<1x32xf32>
    %48 = arith.select %46, %40, %47 : vector<1x32xf32>
    %49 = arith.addf %34, %48 : vector<1x32xf32>
    %c3_i32 = arith.constant 3 : i32
    %50 = arith.addi %0, %c3_i32 : i32
    %51 = arith.index_cast %arg0 : i32 to index
    %52 = arith.index_cast %50 : i32 to index
    %53 = memref.load %arg2[%51, %52] : memref<2x8xi32, #tpu.memory_space<smem>>
    %54 = arith.index_cast %53 : i32 to index
    %c0_16 = arith.constant 0 : index
    %55 = vector.load %arg3[%54, %c0_16] : memref<16x32xf32, #tpu.memory_space<vmem>>, vector<1x32xf32>
    %c0_17 = arith.constant 0 : index
    %56 = arith.index_cast %c3_i32 : i32 to index
    %c0_18 = arith.constant 0 : index
    %57 = vector.load %arg5[%c0_17, %56, %c0_18] : memref<1x8x32xf32, #tpu.memory_space<vmem>>, vector<1x1x32xf32>
    %58 = vector.shape_cast %57 : vector<1x1x32xf32> to vector<1x32xf32>
    %59 = vector.shape_cast %55 : vector<1x32xf32> to vector<1x1x32xf32>
    tpu.vector_store %arg5[%c0_17, %56, %c0_18], %59 {strides = array<i32>} : memref<1x8x32xf32, #tpu.memory_space<vmem>>, vector<1x1x32xf32>,
    %60 = arith.addi %0, %c3_i32 : i32
    %c8_i32_19 = arith.constant 8 : i32
    %61 = arith.cmpi slt, %60, %c8_i32_19 : i32
    %cst_20 = arith.constant 0.000000e+00 : f32
    %62 = vector.broadcast %cst_20 : f32 to vector<1x32xf32>
    %63 = arith.select %61, %55, %62 : vector<1x32xf32>
    %64 = arith.addf %49, %63 : vector<1x32xf32>
    %c4_i32 = arith.constant 4 : i32
    %65 = arith.addi %0, %c4_i32 : i32
    %66 = arith.index_cast %arg0 : i32 to index
    %67 = arith.index_cast %65 : i32 to index
    %68 = memref.load %arg2[%66, %67] : memref<2x8xi32, #tpu.memory_space<smem>>
    %69 = arith.index_cast %68 : i32 to index
    %c0_21 = arith.constant 0 : index
    %70 = vector.load %arg3[%69, %c0_21] : memref<16x32xf32, #tpu.memory_space<vmem>>, vector<1x32xf32>
    %c0_22 = arith.constant 0 : index
    %71 = arith.index_cast %c4_i32 : i32 to index
    %c0_23 = arith.constant 0 : index
    %72 = vector.load %arg5[%c0_22, %71, %c0_23] : memref<1x8x32xf32, #tpu.memory_space<vmem>>, vector<1x1x32xf32>
    %73 = vector.shape_cast %72 : vector<1x1x32xf32> to vector<1x32xf32>
    %74 = vector.shape_cast %70 : vector<1x32xf32> to vector<1x1x32xf32>
    tpu.vector_store %arg5[%c0_22, %71, %c0_23], %74 {strides = array<i32>} : memref<1x8x32xf32, #tpu.memory_space<vmem>>, vector<1x1x32xf32>,
    %75 = arith.addi %0, %c4_i32 : i32
    %c8_i32_24 = arith.constant 8 : i32
    %76 = arith.cmpi slt, %75, %c8_i32_24 : i32
    %cst_25 = arith.constant 0.000000e+00 : f32
    %77 = vector.broadcast %cst_25 : f32 to vector<1x32xf32>
    %78 = arith.select %76, %70, %77 : vector<1x32xf32>
    %79 = arith.addf %64, %78 : vector<1x32xf32>
    %c5_i32 = arith.constant 5 : i32
    %80 = arith.addi %0, %c5_i32 : i32
    %81 = arith.index_cast %arg0 : i32 to index
    %82 = arith.index_cast %80 : i32 to index
    %83 = memref.load %arg2[%81, %82] : memref<2x8xi32, #tpu.memory_space<smem>>
    %84 = arith.index_cast %83 : i32 to index
    %c0_26 = arith.constant 0 : index
    %85 = vector.load %arg3[%84, %c0_26] : memref<16x32xf32, #tpu.memory_space<vmem>>, vector<1x32xf32>
    %c0_27 = arith.constant 0 : index
    %86 = arith.index_cast %c5_i32 : i32 to index
    %c0_28 = arith.constant 0 : index
    %87 = vector.load %arg5[%c0_27, %86, %c0_28] : memref<1x8x32xf32, #tpu.memory_space<vmem>>, vector<1x1x32xf32>
    %88 = vector.shape_cast %87 : vector<1x1x32xf32> to vector<1x32xf32>
    %89 = vector.shape_cast %85 : vector<1x32xf32> to vector<1x1x32xf32>
    tpu.vector_store %arg5[%c0_27, %86, %c0_28], %89 {strides = array<i32>} : memref<1x8x32xf32, #tpu.memory_space<vmem>>, vector<1x1x32xf32>,
    %90 = arith.addi %0, %c5_i32 : i32
    %c8_i32_29 = arith.constant 8 : i32
    %91 = arith.cmpi slt, %90, %c8_i32_29 : i32
    %cst_30 = arith.constant 0.000000e+00 : f32
    %92 = vector.broadcast %cst_30 : f32 to vector<1x32xf32>
    %93 = arith.select %91, %85, %92 : vector<1x32xf32>
    %94 = arith.addf %79, %93 : vector<1x32xf32>
    %c6_i32 = arith.constant 6 : i32
    %95 = arith.addi %0, %c6_i32 : i32
    %96 = arith.index_cast %arg0 : i32 to index
    %97 = arith.index_cast %95 : i32 to index
    %98 = memref.load %arg2[%96, %97] : memref<2x8xi32, #tpu.memory_space<smem>>
    %99 = arith.index_cast %98 : i32 to index
    %c0_31 = arith.constant 0 : index
    %100 = vector.load %arg3[%99, %c0_31] : memref<16x32xf32, #tpu.memory_space<vmem>>, vector<1x32xf32>
    %c0_32 = arith.constant 0 : index
    %101 = arith.index_cast %c6_i32 : i32 to index
    %c0_33 = arith.constant 0 : index
    %102 = vector.load %arg5[%c0_32, %101, %c0_33] : memref<1x8x32xf32, #tpu.memory_space<vmem>>, vector<1x1x32xf32>
    %103 = vector.shape_cast %102 : vector<1x1x32xf32> to vector<1x32xf32>
    %104 = vector.shape_cast %100 : vector<1x32xf32> to vector<1x1x32xf32>
    tpu.vector_store %arg5[%c0_32, %101, %c0_33], %104 {strides = array<i32>} : memref<1x8x32xf32, #tpu.memory_space<vmem>>, vector<1x1x32xf32>,
    %105 = arith.addi %0, %c6_i32 : i32
    %c8_i32_34 = arith.constant 8 : i32
    %106 = arith.cmpi slt, %105, %c8_i32_34 : i32
    %cst_35 = arith.constant 0.000000e+00 : f32
    %107 = vector.broadcast %cst_35 : f32 to vector<1x32xf32>
    %108 = arith.select %106, %100, %107 : vector<1x32xf32>
    %109 = arith.addf %94, %108 : vector<1x32xf32>
    %c7_i32 = arith.constant 7 : i32
    %110 = arith.addi %0, %c7_i32 : i32
    %111 = arith.index_cast %arg0 : i32 to index
    %112 = arith.index_cast %110 : i32 to index
    %113 = memref.load %arg2[%111, %112] : memref<2x8xi32, #tpu.memory_space<smem>>
    %114 = arith.index_cast %113 : i32 to index
    %c0_36 = arith.constant 0 : index
    %115 = vector.load %arg3[%114, %c0_36] : memref<16x32xf32, #tpu.memory_space<vmem>>, vector<1x32xf32>
    %c0_37 = arith.constant 0 : index
    %116 = arith.index_cast %c7_i32 : i32 to index
    %c0_38 = arith.constant 0 : index
    %117 = vector.load %arg5[%c0_37, %116, %c0_38] : memref<1x8x32xf32, #tpu.memory_space<vmem>>, vector<1x1x32xf32>
    %118 = vector.shape_cast %117 : vector<1x1x32xf32> to vector<1x32xf32>
    %119 = vector.shape_cast %115 : vector<1x32xf32> to vector<1x1x32xf32>
    tpu.vector_store %arg5[%c0_37, %116, %c0_38], %119 {strides = array<i32>} : memref<1x8x32xf32, #tpu.memory_space<vmem>>, vector<1x1x32xf32>,
    %120 = arith.addi %0, %c7_i32 : i32
    %c8_i32_39 = arith.constant 8 : i32
    %121 = arith.cmpi slt, %120, %c8_i32_39 : i32
    %cst_40 = arith.constant 0.000000e+00 : f32
    %122 = vector.broadcast %cst_40 : f32 to vector<1x32xf32>
    %123 = arith.select %121, %115, %122 : vector<1x32xf32>
    %124 = arith.addf %109, %123 : vector<1x32xf32>
    %c8_i32_41 = arith.constant 8 : i32
    %c0_42 = arith.constant 0 : index
    %c0_43 = arith.constant 0 : index
    %c0_44 = arith.constant 0 : index
    %125 = vector.load %arg4[%c0_42, %c0_43, %c0_44] : memref<1x1x32xf32, #tpu.memory_space<vmem>>, vector<1x1x32xf32>
    %126 = vector.shape_cast %124 : vector<1x32xf32> to vector<1x1x32xf32>
    %127 = arith.addf %125, %126 : vector<1x1x32xf32>
    %c0_45 = arith.constant 0 : index
    %c0_46 = arith.constant 0 : index
    %c0_47 = arith.constant 0 : index
    %128 = vector.load %arg4[%c0_45, %c0_46, %c0_47] : memref<1x1x32xf32, #tpu.memory_space<vmem>>, vector<1x1x32xf32>
    tpu.vector_store %arg4[%c0_45, %c0_46, %c0_47], %127 {strides = array<i32>} : memref<1x1x32xf32, #tpu.memory_space<vmem>>, vector<1x1x32xf32>,
    %c0_i32_48 = arith.constant 0 : i32
    %129 = arith.cmpi eq, %arg1, %c0_i32_48 : i32
    %130 = arith.extui %129 : i1 to i32
    %c0_i32_49 = arith.constant 0 : i32
    %131 = arith.cmpi ne, %130, %c0_i32_49 : i32
    scf.if %131 {
      %c0_50 = arith.constant 0 : index
      %c0_51 = arith.constant 0 : index
      %c0_52 = arith.constant 0 : index
      %132 = vector.load %arg4[%c0_50, %c0_51, %c0_52] : memref<1x1x32xf32, #tpu.memory_space<vmem>>, vector<1x1x32xf32>
      %cst_53 = arith.constant 1.250000e-01 : f32
      %133 = vector.broadcast %cst_53 : f32 to vector<1x1x32xf32>
      %134 = arith.mulf %132, %133 : vector<1x1x32xf32>
      %c0_54 = arith.constant 0 : index
      %c0_55 = arith.constant 0 : index
      %c0_56 = arith.constant 0 : index
      %135 = vector.load %arg4[%c0_54, %c0_55, %c0_56] : memref<1x1x32xf32, #tpu.memory_space<vmem>>, vector<1x1x32xf32>
      tpu.vector_store %arg4[%c0_54, %c0_55, %c0_56], %134 {strides = array<i32>} : memref<1x1x32xf32, #tpu.memory_space<vmem>>, vector<1x1x32xf32>,
    } else {
    }
    return
  }
  func.func @transform_0(%arg0: i32, %arg1: i32, %arg2: memref<2x8xi32, #tpu.memory_space<smem>>) -> (i32, i32) {
    %c0_i32 = arith.constant 0 : i32
    %c0_i32_0 = arith.constant 0 : i32
    %c0_i32_1 = arith.constant 0 : i32
    return %c0_i32, %c0_i32_0 : i32, i32
  }
  func.func @transform_1(%arg0: i32, %arg1: i32, %arg2: memref<2x8xi32, #tpu.memory_space<smem>>) -> (i32, i32, i32) {
    %c0_i32 = arith.constant 0 : i32
    %c0_i32_0 = arith.constant 0 : i32
    %c0_i32_1 = arith.constant 0 : i32
    return %arg0, %c0_i32, %c0_i32_0 : i32, i32, i32
  }
  func.func @transform_2(%arg0: i32, %arg1: i32, %arg2: memref<2x8xi32, #tpu.memory_space<smem>>) -> (i32, i32, i32) {
    %c0_i32 = arith.constant 0 : i32
    %c0_i32_0 = arith.constant 0 : i32
    return %arg0, %arg1, %c0_i32 : i32, i32, i32
  }
}

</mosaic_0001>

<llo_original>
// kernel: tpu_custom_call.1
$region0: #{tpu_custom_call.1}
  #allocation0 [shape = 'u32[]', space=smem, size = 0x4, offset = 0x4, fixed_abs, tag = 'smem constant byte address 0x4 - core index']
  #allocation1 [shape = 'u32[144,128]{1,0:T(1,128)}', space=vmem, size = 0x12000, scoped, tag = 'internal scratch']
  #allocation2 [shape = 's32[1]{0}', space=sflag, size = 0x4, scoped, tag = 'scoped memory for tpu_custom_call.1']
  #allocation3 [shape = 'u8[1024]{0}', space=smem, size = 0x400, scoped, tag = 'prefetched SMEM operand 0']
  %s0 = inlined_call_operand.hbm [shape: s32[2,8], index: 0, kind: input, shape index: {}]
  %s1 = inlined_call_operand.hbm [shape: f32[16,32], index: 1, kind: input, shape index: {}]
  %s2 = inlined_call_operand.hbm [shape: f32[2,1,32], index: 2, kind: output, shape index: {0}]
  %s3 = inlined_call_operand.hbm [shape: f32[2,8,32], index: 3, kind: output, shape index: {1}]
  %4 = xla_tuple %s2, %s3
  %s5 = sld [smem:[#allocation0]]
  $region57: #{tpu_custom_call.1} parent=0
    _
  %s7 = ssub.s32 1, %s5
  %s8 = scalar_select 0, %s7, %s5
  %10 = dma.hbm_to_smem %s0, 32, [#allocation3], [#allocation2]
  %11 = dma.done [#allocation2], 32
  %12 = sfence
  $region1: #{tpu_custom_call.1} parent=0
    #allocation4 [shape = 'u8[8192]{0}', space=vmem, size = 0x2000, scoped, tag = 'input window, operand 1, single buffered']
    #allocation5 [shape = 's32[2]{0}', space=sflag, size = 0x8, scoped, tag = 'scoped memory for tpu_custom_call.1']
    #allocation6 [shape = 's32[2]{0}', space=sflag, size = 0x8, scoped, tag = 'scoped memory for tpu_custom_call.1']
    #allocation7 [shape = 'u8[1024]{0}', space=vmem, size = 0x400, scoped, tag = 'output window, operand 0']
    #allocation8 [shape = 'u8[8192]{0}', space=vmem, size = 0x2000, scoped, tag = 'output window, operand 1']
    #allocation9 [shape = 's32[2]{0}', space=sflag, size = 0x8, scoped, tag = 'scoped memory for tpu_custom_call.1']
    %13 = vsyncpa [#allocation5], 0
    %14 = vsyncpa [#allocation6], 0
    %s15 = scalar_lea.sflag [#allocation6], 1
    %16 = vsyncpa %s15, 0
    %17 = vsyncpa [#allocation9], 0
    %s18 = scalar_lea.sflag [#allocation9], 1
    %19 = vsyncpa %s18, 0
    loop: start=0, step=1, limit=4
    $region2: #{tpu_custom_call.1} parent=1 // loop_pre_header
      _
    $region3: #{tpu_custom_call.1} parent=1 // loop_header
      %s21 = sphi 0, %s25
      %p22 = scmp.ge.s32.totalorder %s21, 4
      %s28 = sphi 0, %s40
      %s29 = sphi 0, %s36
      %s30 = sphi 0, %s28
      %s31 = sphi 0, %s29
      %s32 = sphi 0, %s30
      %s33 = sphi 0, %s31
      %s41 = sphi 0, %s41
      %s43 = sphi 0, %s41
      %s44 = sphi 0, %s43
      %s58 = sphi 0, %s44
      %s64 = sphi 0, %s66
      %s67 = sphi 0, %s64
      %s68 = sphi 0, %s67
      %s84 = sphi 0, %s68
      %s92 = sphi 0, %s94
      %s95 = sphi 0, %s92
      %s96 = sphi 0, %s95
      %s112 = sphi 0, %s96
    $region4: #{tpu_custom_call.1} parent=1 // loop_header_branch
      %24 = sbr.rel (%p22) target = $region8
    $region5: #{tpu_custom_call.1} parent=1 // loop_body
      %s26 = ssub.s32 %s21, 1
      %s27 = ssub.s32 %s21, 2
      %s34 = sadd.s32 1, %s29
      %p35 = scmp.ge.s32.totalorder %s34, 1
      %s36 = scalar_select %p35, 0, %s34
      %s37 = sadd.s32 1, %s28
      %s38 = scalar_select %p35, %s37, %s28
      %p39 = scmp.ge.s32.totalorder %s38, 2
      %s40 = scalar_select %p39, 0, %s38
      %s42 = sadd.s32 %s41, 1
      %p45 = scmp.eq.s32.totalorder %s21, 1
      %p46 = scmp.ne.s32.totalorder %s41, %s43
      %p47 = scmp.eq.s32.totalorder %s21, 0
      %p48 = por %p46, %p47
      %p49 = scmp.ne.s32.totalorder %s41, %s43
      %p50 = scmp.eq.s32.totalorder %s26, 1
      %p51 = por %p49, %p50
      %p52 = scmp.ne.s32.totalorder %s43, %s44
      %p53 = scmp.eq.s32.totalorder %s26, 0
      %p54 = por %p52, %p53
      %p55 = scmp.ne.s32.totalorder %s43, %s44
      %p56 = scmp.eq.s32.totalorder %s27, 1
      %p57 = por %p55, %p56
      %p59 = scmp.ne.s32.totalorder %s44, %s58
      %p60 = scmp.eq.s32.totalorder %s27, 0
      %p61 = por %p59, %p60
      %s62 = ssub.s32 %s28, %s40
      %p63 = scmp.eq.s32.totalorder %s62, 0
      %s65 = sadd.s32 %s64, 1
      %s66 = scalar_select %p63, %s64, %s65
      %p69 = pneg %p63
      %p70 = scmp.eq.s32.totalorder %s21, 1
      %p71 = por %p69, %p70
      %p72 = scmp.ne.s32.totalorder %s64, %s67
      %p73 = scmp.eq.s32.totalorder %s21, 0
      %p74 = por %p72, %p73
      %p75 = scmp.ne.s32.totalorder %s64, %s67
      %p76 = scmp.eq.s32.totalorder %s26, 1
      %p77 = por %p75, %p76
      %p78 = scmp.ne.s32.totalorder %s67, %s68
      %p79 = scmp.eq.s32.totalorder %s26, 0
      %p80 = por %p78, %p79
      %p81 = scmp.ne.s32.totalorder %s67, %s68
      %p82 = scmp.eq.s32.totalorder %s27, 1
      %p83 = por %p81, %p82
      %p85 = scmp.ne.s32.totalorder %s68, %s84
      %p86 = scmp.eq.s32.totalorder %s27, 0
      %p87 = por %p85, %p86
      %s88 = ssub.s32 %s28, %s40
      %s89 = ssub.s32 %s29, %s36
      %s90 = sor.u32 %s88, %s89
      %p91 = scmp.eq.s32.totalorder %s90, 0
      %s93 = sadd.s32 %s92, 1
      %s94 = scalar_select %p91, %s92, %s93
      %p97 = pneg %p91
      %p98 = scmp.eq.s32.totalorder %s21, 1
      %p99 = por %p97, %p98
      %p100 = scmp.ne.s32.totalorder %s92, %s95
      %p101 = scmp.eq.s32.totalorder %s21, 0
      %p102 = por %p100, %p101
      %p103 = scmp.ne.s32.totalorder %s92, %s95
      %p104 = scmp.eq.s32.totalorder %s26, 1
      %p105 = por %p103, %p104
      %p106 = scmp.ne.s32.totalorder %s95, %s96
      %p107 = scmp.eq.s32.totalorder %s26, 0
      %p108 = por %p106, %p107
      %p109 = scmp.ne.s32.totalorder %s95, %s96
      %p110 = scmp.eq.s32.totalorder %s27, 1
      %p111 = por %p109, %p110
      %p113 = scmp.ne.s32.totalorder %s96, %s112
      %p114 = scmp.eq.s32.totalorder %s27, 0
      %p115 = por %p113, %p114
      %p116 = scmp.le.s32.totalorder 1, %s21
      %p117 = scmp.lt.s32.totalorder %s21, 3
      %p118 = pnand %p116, %p117
      %p119 = pneg %p118
      // Predicated region
      $region9: #{tpu_custom_call.1} parent=5 // pred_check
        _
      $region10: #{tpu_custom_call.1} parent=5 // pred_check_branch
        %121 = sbr.rel (%p118) target = $region12
      $region11: #{tpu_custom_call.1} parent=5 // pred_region
        %s122 = ssub.s32 %s21, 1
        // Predicated region
        $region13: #{tpu_custom_call.1} parent=11 // pred_check
          %p123 = pneg %p54
        $region14: #{tpu_custom_call.1} parent=11 // pred_check_branch
          %125 = sbr.rel (%p123) target = $region16
        $region15: #{tpu_custom_call.1} parent=11 // pred_region
          %s127 = ssub.s32 256, 256
          %128 = vsyncadd [#allocation5], %s127
          %s129 = sshll.u32 [#allocation4], 4
          %s130 = int_to_ptr.vmem [resolvable:$true] %s129
          %135 = dma.hbm_to_vmem [thread:$0]  %s1, 256, %s130, [#allocation5], 128, 128, 8
        $region16: #{tpu_custom_call.1} parent=11 // pred_fallthru
          _
      $region12: #{tpu_custom_call.1} parent=5 // pred_fallthru
        _
      %p136 = scmp.lt.s32.totalorder %s21, 2
      // Predicated region
      $region17: #{tpu_custom_call.1} parent=5 // pred_check
        %p137 = pneg %p136
      $region18: #{tpu_custom_call.1} parent=5 // pred_check_branch
        %139 = sbr.rel (%p137) target = $region20
      $region19: #{tpu_custom_call.1} parent=5 // pred_region
        _
      $region20: #{tpu_custom_call.1} parent=5 // pred_fallthru
        _
      %p140 = scmp.le.s32.totalorder 1, %s21
      %p141 = scmp.lt.s32.totalorder %s21, 3
      %p142 = pnand %p140, %p141
      %p143 = pneg %p142
      // Predicated region
      $region21: #{tpu_custom_call.1} parent=5 // pred_check
        _
      $region22: #{tpu_custom_call.1} parent=5 // pred_check_branch
        %145 = sbr.rel (%p142) target = $region24
      $region23: #{tpu_custom_call.1} parent=5 // pred_region
        %s146 = ssub.s32 %s21, 1
        // Predicated region
        $region25: #{tpu_custom_call.1} parent=23 // pred_check
          %p147 = pneg %p54
        $region26: #{tpu_custom_call.1} parent=23 // pred_check_branch
          %149 = sbr.rel (%p147) target = $region28
        $region27: #{tpu_custom_call.1} parent=23 // pred_region
          %150 = dma.done [#allocation5], 256
        $region28: #{tpu_custom_call.1} parent=23 // pred_fallthru
          _
        %p151 = pneg %p54
        %p152 = pneg %p51
        %p153 = pneg %p80
        %p154 = pneg %p77
        %s155 = sand.u32 %s67, 1
        %s156 = scalar_lea.sflag [#allocation6], %s155
        %s157 = sand.u32 %s67, 1
        %s158 = scalar_lea.vmem [#allocation7], %s157
        %p159 = pneg %p108
        %p160 = pneg %p105
        %s161 = sand.u32 %s95, 1
        %s162 = scalar_lea.sflag [#allocation9], %s161
        %s163 = sand.u32 %s95, 1
        %s164 = smul.addr %s163, 8
        %s165 = scalar_lea.vmem [#allocation8], %s164
        %s166 = smul.u32 %s31, 8
        %p167 = scmp.eq.s32.totalorder %s31, 0
        // Predicated region
        $region29: #{tpu_custom_call.1} parent=23 // pred_check
          %p168 = pneg %p167
        $region30: #{tpu_custom_call.1} parent=23 // pred_check_branch
          %170 = sbr.rel (%p168) target = $region32
        $region31: #{tpu_custom_call.1} parent=23 // pred_region
          %vm171 = vcmask 253952
          %172 = vst.msk [vmem:[%s158] sm:$0x1] %vm171, 0.0
        $region32: #{tpu_custom_call.1} parent=23 // pred_fallthru
          _
        %s173 = sshra.s32 %s166, 7
        %s174 = sand.u32 %s166, 127
        %s175 = sadd.s32 %s173, %s30
        %s176 = smul.u32 %s175, 128
        %s177 = sshra.s32 %s166, 7
        %s178 = sand.u32 %s166, 127
        %s179 = sadd.s32 %s176, %s178
        %s180 = sld [smem:[#allocation3 + %s179]]
        %s181 = scalar_lea.vmem [#allocation4], %s180
        %v182 = vld [vmem:[%s181] sm:$0x1]
        %vm183 = vcmask 253952
        %184 = vst.msk [vmem:[%s165] sm:$0x1] %vm183, %v182
        %p185 = scmp.lt.s32.totalorder %s166, 8
        %s186 = scalar_select %p185, 1, 0
        %v187 = vstv %s186
        %vm188 = vcmp.eq.s32.totalorder %v187, 1
        %v189 = vsel %vm188, %v182, 0.0
        %v190 = vadd.f32 %v189, 0.0
        %s191 = sadd.s32 %s166, 1
        %s192 = sshra.s32 %s191, 7
        %s193 = sand.u32 %s191, 127
        %s194 = sadd.s32 %s192, %s30
        %s195 = smul.u32 %s194, 128
        %s196 = sshra.s32 %s191, 7
        %s197 = sand.u32 %s191, 127
        %s198 = sadd.s32 %s195, %s197
        %s199 = sld [smem:[#allocation3 + %s198]]
        %s200 = scalar_lea.vmem [#allocation4], %s199
        %v201 = vld [vmem:[%s200] sm:$0x1]
        %202 = vst.msk [vmem:[%s165 + $0x1] sm:$0x1] %vm183, %v201
        %p203 = scmp.lt.s32.totalorder %s191, 8
        %s204 = scalar_select %p203, 1, 0
        %v205 = vstv %s204
        %vm206 = vcmp.eq.s32.totalorder %v205, 1
        %v207 = vsel %vm206, %v201, 0.0
        %v208 = vadd.f32 %v190, %v207
        %s209 = sadd.s32 %s166, 2
        %s210 = sshra.s32 %s209, 7
        %s211 = sand.u32 %s209, 127
        %s212 = sadd.s32 %s210, %s30
        %s213 = smul.u32 %s212, 128
        %s214 = sshra.s32 %s209, 7
        %s215 = sand.u32 %s209, 127
        %s216 = sadd.s32 %s213, %s215
        %s217 = sld [smem:[#allocation3 + %s216]]
        %s218 = scalar_lea.vmem [#allocation4], %s217
        %v219 = vld [vmem:[%s218] sm:$0x1]
        %220 = vst.msk [vmem:[%s165 + $0x2] sm:$0x1] %vm183, %v219
        %p221 = scmp.lt.s32.totalorder %s209, 8
        %s222 = scalar_select %p221, 1, 0
        %v223 = vstv %s222
        %vm224 = vcmp.eq.s32.totalorder %v223, 1
        %v225 = vsel %vm224, %v219, 0.0
        %v226 = vadd.f32 %v208, %v225
        %s227 = sadd.s32 %s166, 3
        %s228 = sshra.s32 %s227, 7
        %s229 = sand.u32 %s227, 127
        %s230 = sadd.s32 %s228, %s30
        %s231 = smul.u32 %s230, 128
        %s232 = sshra.s32 %s227, 7
        %s233 = sand.u32 %s227, 127
        %s234 = sadd.s32 %s231, %s233
        %s235 = sld [smem:[#allocation3 + %s234]]
        %s236 = scalar_lea.vmem [#allocation4], %s235
        %v237 = vld [vmem:[%s236] sm:$0x1]
        %238 = vst.msk [vmem:[%s165 + $0x3] sm:$0x1] %vm183, %v237
        %p239 = scmp.lt.s32.totalorder %s227, 8
        %s240 = scalar_select %p239, 1, 0
        %v241 = vstv %s240
        %vm242 = vcmp.eq.s32.totalorder %v241, 1
        %v243 = vsel %vm242, %v237, 0.0
        %v244 = vadd.f32 %v226, %v243
        %s245 = sadd.s32 %s166, 4
        %s246 = sshra.s32 %s245, 7
        %s247 = sand.u32 %s245, 127
        %s248 = sadd.s32 %s246, %s30
        %s249 = smul.u32 %s248, 128
        %s250 = sshra.s32 %s245, 7
        %s251 = sand.u32 %s245, 127
        %s252 = sadd.s32 %s249, %s251
        %s253 = sld [smem:[#allocation3 + %s252]]
        %s254 = scalar_lea.vmem [#allocation4], %s253
        %v255 = vld [vmem:[%s254] sm:$0x1]
        %256 = vst.msk [vmem:[%s165 + $0x4] sm:$0x1] %vm183, %v255
        %p257 = scmp.lt.s32.totalorder %s245, 8
        %s258 = scalar_select %p257, 1, 0
        %v259 = vstv %s258
        %vm260 = vcmp.eq.s32.totalorder %v259, 1
        %v261 = vsel %vm260, %v255, 0.0
        %v262 = vadd.f32 %v244, %v261
        %s263 = sadd.s32 %s166, 5
        %s264 = sshra.s32 %s263, 7
        %s265 = sand.u32 %s263, 127
        %s266 = sadd.s32 %s264, %s30
        %s267 = smul.u32 %s266, 128
        %s268 = sshra.s32 %s263, 7
        %s269 = sand.u32 %s263, 127
        %s270 = sadd.s32 %s267, %s269
        %s271 = sld [smem:[#allocation3 + %s270]]
        %s272 = scalar_lea.vmem [#allocation4], %s271
        %v273 = vld [vmem:[%s272] sm:$0x1]
        %274 = vst.msk [vmem:[%s165 + $0x5] sm:$0x1] %vm183, %v273
        %p275 = scmp.lt.s32.totalorder %s263, 8
        %s276 = scalar_select %p275, 1, 0
        %v277 = vstv %s276
        %vm278 = vcmp.eq.s32.totalorder %v277, 1
        %v279 = vsel %vm278, %v273, 0.0
        %v280 = vadd.f32 %v262, %v279
        %s281 = sadd.s32 %s166, 6
        %s282 = sshra.s32 %s281, 7
        %s283 = sand.u32 %s281, 127
        %s284 = sadd.s32 %s282, %s30
        %s285 = smul.u32 %s284, 128
        %s286 = sshra.s32 %s281, 7
        %s287 = sand.u32 %s281, 127
        %s288 = sadd.s32 %s285, %s287
        %s289 = sld [smem:[#allocation3 + %s288]]
        %s290 = scalar_lea.vmem [#allocation4], %s289
        %v291 = vld [vmem:[%s290] sm:$0x1]
        %292 = vst.msk [vmem:[%s165 + $0x6] sm:$0x1] %vm183, %v291
        %p293 = scmp.lt.s32.totalorder %s281, 8
        %s294 = scalar_select %p293, 1, 0
        %v295 = vstv %s294
        %vm296 = vcmp.eq.s32.totalorder %v295, 1
        %v297 = vsel %vm296, %v291, 0.0
        %v298 = vadd.f32 %v280, %v297
        %s299 = sadd.s32 %s166, 7
        %s300 = sshra.s32 %s299, 7
        %s301 = sand.u32 %s299, 127
        %s302 = sadd.s32 %s300, %s30
        %s303 = smul.u32 %s302, 128
        %s304 = sshra.s32 %s299, 7
        %s305 = sand.u32 %s299, 127
        %s306 = sadd.s32 %s303, %s305
        %s307 = sld [smem:[#allocation3 + %s306]]
        %s308 = scalar_lea.vmem [#allocation4], %s307
        %v309 = vld [vmem:[%s308] sm:$0x1]
        %310 = vst.msk [vmem:[%s165 + $0x7] sm:$0x1] %vm183, %v309
        %p311 = scmp.lt.s32.totalorder %s299, 8
        %s312 = scalar_select %p311, 1, 0
        %v313 = vstv %s312
        %vm314 = vcmp.eq.s32.totalorder %v313, 1
        %v315 = vsel %vm314, %v309, 0.0
        %v316 = vadd.f32 %v298, %v315
        %v317 = vld [vmem:[%s158] sm:$0x1]
        %v318 = vadd.f32 %v317, %v316
        %319 = vst.msk [vmem:[%s158] sm:$0x1] %vm183, %v318
        // Predicated region
        $region33: #{tpu_custom_call.1} parent=23 // pred_check
          %p320 = pneg %p167
        $region34: #{tpu_custom_call.1} parent=23 // pred_check_branch
          %322 = sbr.rel (%p320) target = $region36
        $region35: #{tpu_custom_call.1} parent=23 // pred_region
          %v323 = vld [vmem:[%s158] sm:$0x1]
          %v324 = vmul.f32 %v323, 0.125
          %325 = vst.msk [vmem:[%s158] sm:$0x1] %vm183, %v324
        $region36: #{tpu_custom_call.1} parent=23 // pred_fallthru
          _
        %s326 = sand.u32 %s67, 1
        %s327 = scalar_lea.sflag [#allocation6], %s326
        %s328 = sand.u32 %s67, 1
        %s329 = scalar_lea.vmem [#allocation7], %s328
        %s330 = sand.u32 %s95, 1
        %s331 = scalar_lea.sflag [#allocation9], %s330
        %s332 = sand.u32 %s95, 1
        %s333 = smul.addr %s332, 8
        %s334 = scalar_lea.vmem [#allocation8], %s333
        // Predicated region
        $region37: #{tpu_custom_call.1} parent=23 // pred_check
          %p335 = pneg %p77
        $region38: #{tpu_custom_call.1} parent=23 // pred_check_branch
          %337 = sbr.rel (%p335) target = $region40
        $region39: #{tpu_custom_call.1} parent=23 // pred_region
          %s339 = ssub.s32 16, 16
          %340 = vsyncadd %s327, %s339
          %s341 = smul.addr %s30, 16
          %s342 = scalar_lea.hbm %s2, %s341
          %s344 = sshll.u32 %s329, 4
          %s345 = int_to_ptr.vmem [resolvable:$true] %s344
          %347 = dma.vmem_to_hbm [thread:$0]  %s345, 16, %s342, %s327
        $region40: #{tpu_custom_call.1} parent=23 // pred_fallthru
          _
        // Predicated region
        $region41: #{tpu_custom_call.1} parent=23 // pred_check
          %p348 = pneg %p105
        $region42: #{tpu_custom_call.1} parent=23 // pred_check_branch
          %350 = sbr.rel (%p348) target = $region44
        $region43: #{tpu_custom_call.1} parent=23 // pred_region
          %s352 = ssub.s32 128, 128
          %353 = vsyncadd %s331, %s352
          %s354 = sadd.s32 %s31, %s30
          %s355 = smul.addr %s354, 128
          %s356 = scalar_lea.hbm %s3, %s355
          %s358 = sshll.u32 %s334, 4
          %s359 = int_to_ptr.vmem [resolvable:$true] %s358
          %361 = dma.vmem_to_hbm [thread:$0]  %s359, 128, %s356, %s331
        $region44: #{tpu_custom_call.1} parent=23 // pred_fallthru
          _
      $region24: #{tpu_custom_call.1} parent=5 // pred_fallthru
        _
      %p362 = scmp.le.s32.totalorder 2, %s21
      // Predicated region
      $region45: #{tpu_custom_call.1} parent=5 // pred_check
        %p363 = pneg %p362
      $region46: #{tpu_custom_call.1} parent=5 // pred_check_branch
        %365 = sbr.rel (%p363) target = $region48
      $region47: #{tpu_custom_call.1} parent=5 // pred_region
        %s366 = ssub.s32 %s21, 2
        // Predicated region
        $region49: #{tpu_custom_call.1} parent=47 // pred_check
          %p367 = pneg %p83
        $region50: #{tpu_custom_call.1} parent=47 // pred_check_branch
          %369 = sbr.rel (%p367) target = $region52
        $region51: #{tpu_custom_call.1} parent=47 // pred_region
          %s370 = sand.u32 %s68, 1
          %s371 = scalar_lea.sflag [#allocation6], %s370
          %s372 = sand.u32 %s68, 1
          %s373 = scalar_lea.vmem [#allocation7], %s372
          %374 = dma.done %s371, 16
        $region52: #{tpu_custom_call.1} parent=47 // pred_fallthru
          _
        // Predicated region
        $region53: #{tpu_custom_call.1} parent=47 // pred_check
          %p375 = pneg %p111
        $region54: #{tpu_custom_call.1} parent=47 // pred_check_branch
          %377 = sbr.rel (%p375) target = $region56
        $region55: #{tpu_custom_call.1} parent=47 // pred_region
          %s378 = sand.u32 %s96, 1
          %s379 = scalar_lea.sflag [#allocation9], %s378
          %s380 = sand.u32 %s96, 1
          %s381 = smul.addr %s380, 8
          %s382 = scalar_lea.vmem [#allocation8], %s381
          %383 = dma.done %s379, 128
        $region56: #{tpu_custom_call.1} parent=47 // pred_fallthru
          _
      $region48: #{tpu_custom_call.1} parent=5 // pred_fallthru
        _
    $region6: #{tpu_custom_call.1} parent=1 // loop_footer
      %s25 = sadd.s32 1, %s21
    $region7: #{tpu_custom_call.1} parent=1 // loop_footer_branch
      %20 = sbr.rel target = $region3
    $region8: #{tpu_custom_call.1} parent=1 // loop_exit
      _
    %384 = vsyncpa [#allocation5], 1
    %s385 = scalar_lea.sflag [#allocation5], 1
    %386 = vsyncpa %s385, 1
    %387 = vsyncpa [#allocation6], 1
    %s388 = scalar_lea.sflag [#allocation6], 1
    %389 = vsyncpa %s388, 1
    %390 = vsyncpa [#allocation9], 1
    %s391 = scalar_lea.sflag [#allocation9], 1
    %392 = vsyncpa %s391, 1

</llo_original>
